<compile_context>
chip_gen: v7x
topology: tpu7x:2x2x1
jax: 0.10.0
libtpu: 0.0.40
codegen_flags: <defaults>
</compile_context>

<pallas_src>
import functools

import jax
import jax.numpy as jnp
from jax import lax
from jax.experimental import pallas as pl
from jax.experimental.pallas import tpu as pltpu


def _triple(v):
    if isinstance(v, (tuple, list)):
        return tuple(v)
    return (v, v, v)


def _round_up(x, m):
    return ((x + m - 1) // m) * m


def _largest_divisor_leq(total, target, multiple_of=1):
    """Largest divisor of `total` that is <= target and a multiple of
    `multiple_of`; falls back to `total` (a full-extent block is always legal)."""
    target = min(target, total)
    target -= target % multiple_of
    t = target
    while t >= multiple_of:
        if total % t == 0:
            return t
        t -= multiple_of
    return total


def _window_unpool_kernel(base_ref, v_ref, i_ref, o_ref, *, offsets):
    """Fast path (stride == kernel_size).

    base_ref: (1, S_T)    int32  flat output index of each element's window origin
    v_ref:    (BNC, S_T)         pooled values
    i_ref:    (BNC, S_T)  int32  flat output indices (per (n, c) plane)
    o_ref:    (K, BNC, S_T)      o[k, b, s] = v[b, s] if i[b, s] hits slot k else 0
    """
    rel = i_ref[...] - base_ref[...]            # (BNC, S_T) offset inside own window
    vals = v_ref[...]
    zero = jnp.zeros_like(vals)
    for k, off_k in enumerate(offsets):         # K = kd*kh*kw is small -> unrolled
        o_ref[k] = jnp.where(rel == off_k, vals, zero)


def _dense_unpool_kernel(v_ref, i_ref, o_ref):
    """General fallback: dense one-hot scatter over one L-tile of one plane.

    v_ref: (1, S, 1); i_ref: (1, S, 1) int32; o_ref: (1, L_T).
    """
    vals = v_ref[0].astype(jnp.float32)         # (S, 1)
    idx = i_ref[0]                              # (S, 1)
    s = vals.shape[0]
    lt = o_ref.shape[1]
    start = pl.program_id(1) * lt
    pos = lax.broadcasted_iota(jnp.int32, (s, lt), 1) + start
    onehot = idx == pos                         # (S, L_T)
    out = jnp.sum(jnp.where(onehot, vals, 0.0), axis=0, keepdims=True)
    o_ref[...] = out.astype(o_ref.dtype)


def _vmem_plan():
    """Hardware-aware (double-buffered) VMEM working-set budget + limit."""
    try:
        cap = pltpu.get_tpu_info().vmem_capacity_bytes
    except Exception:  # unknown / interpret — assume the smallest (v7x-like)
        cap = 64 * 1024 * 1024
    if cap >= 100 * 1024 * 1024:          # v5e / v6e: 128 MiB physical VMEM
        return 24 * 1024 * 1024, 64 * 1024 * 1024
    return 16 * 1024 * 1024, 40 * 1024 * 1024   # v7x: 64 MiB per TensorCore


def crop_max_unpool3d(f_maps, indices, kernel_size, stride, padding=None):
    """JAX/Pallas equivalent of CropMaxUnpool3d.forward (NCDHW)."""
    N, C, Din, Hin, Win = f_maps.shape
    kd, kh, kw = _triple(kernel_size)
    sd, sh, sw = _triple(stride)

    Dout = (Din - 1) * sd + kd
    Hout = (Hin - 1) * sh + kh
    Wout = (Win - 1) * sw + kw

    S = Din * Hin * Win
    L = Dout * Hout * Wout
    NC = N * C

    vals = f_maps.reshape(NC, S)                       # keep input dtype (bf16 stays bf16)
    idx = indices.reshape(NC, S).astype(jnp.int32)

    if (kd, kh, kw) == (sd, sh, sw):
        # ---------------- fast path: non-overlapping windows -----------------
        K = kd * kh * kw
        itemsize = jnp.dtype(f_maps.dtype).itemsize
        packing = {1: 32, 2: 16}.get(itemsize, 8)       # sublanes per packed vreg

        # Sublane batching: match dtype packing; only pad NC when it already
        # spans >= one packed vreg (keeps wasted HBM traffic <= (packing-1)/NC).
        if NC >= packing:
            bnc = packing
            NC_pad = _round_up(NC, packing)
        else:
            bnc = NC
            NC_pad = NC

        # Lane padding: multiple of 128 so every store is an unmasked `vst`.
        S_pad = _round_up(S, 128)

        if NC_pad != NC or S_pad != S:
            vals = jnp.pad(vals, ((0, NC_pad - NC), (0, S_pad - S)))
            # -1 sentinel: rel = -1 - base < 0 never matches any slot offset.
            idx = jnp.pad(idx, ((0, NC_pad - NC), (0, S_pad - S)),
                          constant_values=-1)

        # Flat output index of each input element's window origin (per plane).
        d = jnp.arange(Din, dtype=jnp.int32)[:, None, None]
        h = jnp.arange(Hin, dtype=jnp.int32)[None, :, None]
        w = jnp.arange(Win, dtype=jnp.int32)[None, None, :]
        base = (d * sd) * (Hout * Wout) + (h * sh) * Wout + (w * sw)
        base = base.reshape(1, S)
        if S_pad != S:
            base = jnp.pad(base, ((0, 0), (0, S_pad - S)))

        # Compile-time constant offset of window slot k inside the output plane
        # (od-major, matching the (kd, kh, kw, ...) reshape below).
        offsets = tuple(
            od * (Hout * Wout) + oh * Wout + ow
            for od in range(kd) for oh in range(kh) for ow in range(kw))

        # Tile selection: largest lane-dense tile that keeps the double-buffered
        # working set inside the per-generation VMEM budget.
        vmem_budget, vmem_limit = _vmem_plan()
        bytes_per_col = 2 * (bnc * (itemsize + 4) + 4 + K * bnc * itemsize)
        s_target = max(128, min(32768, vmem_budget // bytes_per_col))
        s_tile = _largest_divisor_leq(S_pad, s_target, 128)

        # v7x megacore: guarantee >= 2 parallel grid steps when possible.
        if NC_pad // bnc == 1 and S_pad // s_tile == 1 and S_pad >= 256:
            s_tile = _largest_divisor_leq(S_pad, S_pad // 2, 128)

        # Grid ordered (S-tiles, NC-tiles): the inner NC loop keeps the shared
        # `base` block index constant, so it is only fetched once per S-tile.
        grid = (S_pad // s_tile, NC_pad // bnc)

        in_bytes = NC_pad * S_pad * (itemsize + 4) + S_pad * 4
        out_bytes = K * NC_pad * S_pad * itemsize
        cost = pl.CostEstimate(flops=2 * K * NC_pad * S_pad,
                               transcendentals=0,
                               bytes_accessed=in_bytes + out_bytes)

        out = pl.pallas_call(
            functools.partial(_window_unpool_kernel, offsets=offsets),
            out_shape=jax.ShapeDtypeStruct((K, NC_pad, S_pad), f_maps.dtype),
            grid=grid,
            in_specs=[
                pl.BlockSpec((1, s_tile), lambda s, b: (0, s)),
                pl.BlockSpec((bnc, s_tile), lambda s, b: (b, s)),
                pl.BlockSpec((bnc, s_tile), lambda s, b: (b, s)),
            ],
            out_specs=pl.BlockSpec((K, bnc, s_tile), lambda s, b: (0, b, s)),
            compiler_params=pltpu.CompilerParams(
                dimension_semantics=("parallel", "parallel"),
                vmem_limit_bytes=vmem_limit),
            cost_estimate=cost,
        )(base, vals, idx)

        if NC_pad != NC or S_pad != S:
            out = out[:, :NC, :S]

        # (K, NC, S) -> (N, C, Din, kd, Hin, kh, Win, kw) -> (N, C, Dout, Hout, Wout)
        out = out.reshape(kd, kh, kw, N, C, Din, Hin, Win)
        out = out.transpose(3, 4, 5, 0, 6, 1, 7, 2)
        output = out.reshape(N, C, Dout, Hout, Wout)
    else:
        # -------- general fallback: overlapping windows, tiled over L ---------
        vals3 = vals.reshape(NC, S, 1)
        idx3 = idx.reshape(NC, S, 1)
        if L % 128 == 0:
            col_bytes = S * 12 + 16            # int32 iota + mask + f32 temp per col
            l_target = max(128, min(4096, (6 * 1024 * 1024) // col_bytes))
            l_tile = _largest_divisor_leq(L, l_target, 128)
        else:
            l_tile = L
        out_flat = pl.pallas_call(
            _dense_unpool_kernel,
            out_shape=jax.ShapeDtypeStruct((NC, L), f_maps.dtype),
            grid=(NC, L // l_tile),
            in_specs=[
                pl.BlockSpec((1, S, 1), lambda b, j: (b, 0, 0)),
                pl.BlockSpec((1, S, 1), lambda b, j: (b, 0, 0)),
            ],
            out_specs=pl.BlockSpec((1, l_tile), lambda b, j: (b, j)),
            compiler_params=pltpu.CompilerParams(
                dimension_semantics=("parallel", "parallel")),
        )(vals3, idx3)
        output = out_flat.reshape(N, C, Dout, Hout, Wout)

    if padding is not None:
        x1 = padding[4]
        y1 = padding[2]
        z1 = padding[0]
        # TODO(synk): verify in xprof that this slice fuses with the transpose;
        # it is kept outside the kernel because the crop offset does not align
        # with window boundaries in general.
        output = output[:, :, x1:, y1:, z1:]
    return output


def _reference_unpool(f_maps, indices, kernel_size, stride, padding=None):
    """Pure-JAX reference (scatter via .at[].set) for correctness checking."""
    N, C, Din, Hin, Win = f_maps.shape
    kd, kh, kw = _triple(kernel_size)
    sd, sh, sw = _triple(stride)
    Dout = (Din - 1) * sd + kd
    Hout = (Hin - 1) * sh + kh
    Wout = (Win - 1) * sw + kw
    L = Dout * Hout * Wout
    NC = N * C
    S = Din * Hin * Win

    vals = f_maps.reshape(NC, S)
    idx = indices.reshape(NC, S).astype(jnp.int32)
    flat_pos = (jnp.arange(NC, dtype=jnp.int32)[:, None] * L + idx).reshape(-1)
    out = jnp.zeros((NC * L,), f_maps.dtype).at[flat_pos].set(vals.reshape(-1))
    out = out.reshape(N, C, Dout, Hout, Wout)
    if padding is not None:
        x1, y1, z1 = padding[4], padding[2], padding[0]
        out = out[:, :, x1:, y1:, z1:]
    return out


def _make_valid_indices(key, shape, ks, st, Hout, Wout):
    """Valid max-pool indices: one position per non-overlapping window."""
    N, C, Din, Hin, Win = shape
    off = jax.random.randint(key, (N, C, Din, Hin, Win, 3), 0, min(ks, st))
    d_pos = jnp.arange(Din)[None, None, :, None, None] * st + off[..., 0]
    h_pos = jnp.arange(Hin)[None, None, None, :, None] * st + off[..., 1]
    w_pos = jnp.arange(Win)[None, None, None, None, :] * st + off[..., 2]
    return (d_pos * (Hout * Wout) + h_pos * Wout + w_pos).astype(jnp.int32)


if __name__ == "__main__":
    key = jax.random.PRNGKey(0)
    k1, k2, k3, k4, k5, k6, k7, k8 = jax.random.split(key, 8)

    # ---- Fast path, f32: stride == kernel_size (the module's configuration).
    N, C = 2, 4
    Din = Hin = Win = 4
    ks, st = 2, 2
    Dout = (Din - 1) * st + ks
    Hout = (Hin - 1) * st + ks
    Wout = (Win - 1) * st + ks

    f_maps = jax.random.normal(k1, (N, C, Din, Hin, Win), dtype=jnp.float32)
    indices = _make_valid_indices(k2, f_maps.shape, ks, st, Hout, Wout)
    padding = [1, 0, 1, 0, 1, 0]   # F.pad order: (W_l, W_r, H_l, H_r, D_l, D_r)

    out_nocrop = crop_max_unpool3d(f_maps, indices, ks, st, None)
    out_crop = crop_max_unpool3d(f_maps, indices, ks, st, padding)
    jax.block_until_ready(out_nocrop)
    jax.block_until_ready(out_crop)
    ref_nocrop = _reference_unpool(f_maps, indices, ks, st, None)
    ref_crop = _reference_unpool(f_maps, indices, ks, st, padding)
    assert out_nocrop.shape == (N, C, Dout, Hout, Wout)
    assert out_crop.shape == (N, C, Dout - 1, Hout - 1, Wout - 1)
    assert jnp.allclose(out_nocrop, ref_nocrop, atol=1e-6, rtol=1e-6)
    assert jnp.allclose(out_crop, ref_crop, atol=1e-6, rtol=1e-6)

    # ---- Fast path, bf16 with NC=16 (exercises bnc=16 sublane packing + S pad).
    Nb, Cb = 2, 8
    fb = jax.random.normal(k3, (Nb, Cb, Din, Hin, Win), dtype=jnp.bfloat16)
    ib = _make_valid_indices(k4, fb.shape, ks, st, Hout, Wout)
    ob = crop_max_unpool3d(fb, ib, ks, st, None)
    jax.block_until_ready(ob)
    rb = _reference_unpool(fb, ib, ks, st, None)
    assert ob.shape == (Nb, Cb, Dout, Hout, Wout)
    assert jnp.allclose(ob.astype(jnp.float32), rb.astype(jnp.float32))

    # ---- Fast path, small NC (< 8) and non-128-multiple S (exercises padding).
    Ns, Cs, Ds = 1, 3, 3
    Dos = (Ds - 1) * st + ks
    fs = jax.random.normal(k5, (Ns, Cs, Ds, Ds, Ds), dtype=jnp.float32)
    i_s = _make_valid_indices(k6, fs.shape, ks, st, Dos, Dos)
    osmall = crop_max_unpool3d(fs, i_s, ks, st, None)
    jax.block_until_ready(osmall)
    rsmall = _reference_unpool(fs, i_s, ks, st, None)
    assert osmall.shape == (Ns, Cs, Dos, Dos, Dos)
    assert jnp.allclose(osmall, rsmall, atol=1e-6, rtol=1e-6)

    # ---- General fallback: stride != kernel_size (overlapping windows).
    N2, C2, D2 = 1, 2, 3
    ks2, st2 = 3, 2
    Do2 = (D2 - 1) * st2 + ks2
    f2 = jax.random.normal(k7, (N2, C2, D2, D2, D2), dtype=jnp.float32)
    # Offsets restricted to [0, stride) so synthesized indices never collide.
    idx2 = _make_valid_indices(k8, f2.shape, ks2, st2, Do2, Do2)
    out2 = crop_max_unpool3d(f2, idx2, ks2, st2, None)
    jax.block_until_ready(out2)
    ref2 = _reference_unpool(f2, idx2, ks2, st2, None)
    assert out2.shape == (N2, C2, Do2, Do2, Do2)
    assert jnp.allclose(out2, ref2, atol=1e-6, rtol=1e-6)

    print("KERNEL_OK")
</pallas_src>

<mosaic_0001>
module attributes {stable_mosaic.version = 11 : i64} {
  func.func @_window_unpool_kernel(%arg0: i32, %arg1: i32, %arg2: memref<1x128xi32, #tpu.memory_space<vmem>>, %arg3: memref<8x128xf32, #tpu.memory_space<vmem>>, %arg4: memref<8x128xi32, #tpu.memory_space<vmem>>, %arg5: memref<8x8x128xf32, #tpu.memory_space<vmem>>) attributes {dimension_semantics = [#tpu.dimension_semantics<parallel>, #tpu.dimension_semantics<parallel>], iteration_bounds = array<i64: 1, 1>, scalar_prefetch = 0 : i64, scratch_operands = 0 : i64, tpu.core_type = #tpu.core_type<tc>, window_params = [{transform_indices = @transform_0, window_bounds = array<i64: 1, 128>}, {transform_indices = @transform_1, window_bounds = array<i64: 8, 128>}, {transform_indices = @transform_2, window_bounds = array<i64: 8, 128>}, {transform_indices = @transform_3, window_bounds = array<i64: 8, 8, 128>}]} {
    %c0 = arith.constant 0 : index
    %c0_0 = arith.constant 0 : index
    %0 = vector.load %arg4[%c0, %c0_0] : memref<8x128xi32, #tpu.memory_space<vmem>>, vector<8x128xi32>
    %c0_1 = arith.constant 0 : index
    %c0_2 = arith.constant 0 : index
    %1 = vector.load %arg2[%c0_1, %c0_2] : memref<1x128xi32, #tpu.memory_space<vmem>>, vector<1x128xi32>
    %2 = vector.broadcast %1 : vector<1x128xi32> to vector<8x128xi32>
    %3 = arith.subi %0, %2 : vector<8x128xi32>
    %c0_3 = arith.constant 0 : index
    %c0_4 = arith.constant 0 : index
    %4 = vector.load %arg3[%c0_3, %c0_4] : memref<8x128xf32, #tpu.memory_space<vmem>>, vector<8x128xf32>
    %cst = arith.constant 0.000000e+00 : f32
    %5 = vector.broadcast %cst : f32 to vector<8x128xf32>
    %c0_i32 = arith.constant 0 : i32
    %6 = vector.broadcast %c0_i32 : i32 to vector<8x128xi32>
    %7 = arith.cmpi eq, %3, %6 : vector<8x128xi32>
    %8 = arith.select %7, %4, %5 : vector<8x128xi1>, vector<8x128xf32>
    %c0_5 = arith.constant 0 : index
    %c0_6 = arith.constant 0 : index
    %c0_7 = arith.constant 0 : index
    %9 = vector.load %arg5[%c0_5, %c0_6, %c0_7] : memref<8x8x128xf32, #tpu.memory_space<vmem>>, vector<1x8x128xf32>
    %10 = vector.shape_cast %9 : vector<1x8x128xf32> to vector<8x128xf32>
    %11 = vector.shape_cast %8 : vector<8x128xf32> to vector<1x8x128xf32>
    tpu.vector_store %arg5[%c0_5, %c0_6, %c0_7], %11 {strides = array<i32>} : memref<8x8x128xf32, #tpu.memory_space<vmem>>, vector<1x8x128xf32>,
    %c1_i32 = arith.constant 1 : i32
    %12 = vector.broadcast %c1_i32 : i32 to vector<8x128xi32>
    %13 = arith.cmpi eq, %3, %12 : vector<8x128xi32>
    %14 = arith.select %13, %4, %5 : vector<8x128xi1>, vector<8x128xf32>
    %c1 = arith.constant 1 : index
    %c0_8 = arith.constant 0 : index
    %c0_9 = arith.constant 0 : index
    %15 = vector.load %arg5[%c1, %c0_8, %c0_9] : memref<8x8x128xf32, #tpu.memory_space<vmem>>, vector<1x8x128xf32>
    %16 = vector.shape_cast %15 : vector<1x8x128xf32> to vector<8x128xf32>
    %17 = vector.shape_cast %14 : vector<8x128xf32> to vector<1x8x128xf32>
    tpu.vector_store %arg5[%c1, %c0_8, %c0_9], %17 {strides = array<i32>} : memref<8x8x128xf32, #tpu.memory_space<vmem>>, vector<1x8x128xf32>,
    %c8_i32 = arith.constant 8 : i32
    %18 = vector.broadcast %c8_i32 : i32 to vector<8x128xi32>
    %19 = arith.cmpi eq, %3, %18 : vector<8x128xi32>
    %20 = arith.select %19, %4, %5 : vector<8x128xi1>, vector<8x128xf32>
    %c2 = arith.constant 2 : index
    %c0_10 = arith.constant 0 : index
    %c0_11 = arith.constant 0 : index
    %21 = vector.load %arg5[%c2, %c0_10, %c0_11] : memref<8x8x128xf32, #tpu.memory_space<vmem>>, vector<1x8x128xf32>
    %22 = vector.shape_cast %21 : vector<1x8x128xf32> to vector<8x128xf32>
    %23 = vector.shape_cast %20 : vector<8x128xf32> to vector<1x8x128xf32>
    tpu.vector_store %arg5[%c2, %c0_10, %c0_11], %23 {strides = array<i32>} : memref<8x8x128xf32, #tpu.memory_space<vmem>>, vector<1x8x128xf32>,
    %c9_i32 = arith.constant 9 : i32
    %24 = vector.broadcast %c9_i32 : i32 to vector<8x128xi32>
    %25 = arith.cmpi eq, %3, %24 : vector<8x128xi32>
    %26 = arith.select %25, %4, %5 : vector<8x128xi1>, vector<8x128xf32>
    %c3 = arith.constant 3 : index
    %c0_12 = arith.constant 0 : index
    %c0_13 = arith.constant 0 : index
    %27 = vector.load %arg5[%c3, %c0_12, %c0_13] : memref<8x8x128xf32, #tpu.memory_space<vmem>>, vector<1x8x128xf32>
    %28 = vector.shape_cast %27 : vector<1x8x128xf32> to vector<8x128xf32>
    %29 = vector.shape_cast %26 : vector<8x128xf32> to vector<1x8x128xf32>
    tpu.vector_store %arg5[%c3, %c0_12, %c0_13], %29 {strides = array<i32>} : memref<8x8x128xf32, #tpu.memory_space<vmem>>, vector<1x8x128xf32>,
    %c64_i32 = arith.constant 64 : i32
    %30 = vector.broadcast %c64_i32 : i32 to vector<8x128xi32>
    %31 = arith.cmpi eq, %3, %30 : vector<8x128xi32>
    %32 = arith.select %31, %4, %5 : vector<8x128xi1>, vector<8x128xf32>
    %c4 = arith.constant 4 : index
    %c0_14 = arith.constant 0 : index
    %c0_15 = arith.constant 0 : index
    %33 = vector.load %arg5[%c4, %c0_14, %c0_15] : memref<8x8x128xf32, #tpu.memory_space<vmem>>, vector<1x8x128xf32>
    %34 = vector.shape_cast %33 : vector<1x8x128xf32> to vector<8x128xf32>
    %35 = vector.shape_cast %32 : vector<8x128xf32> to vector<1x8x128xf32>
    tpu.vector_store %arg5[%c4, %c0_14, %c0_15], %35 {strides = array<i32>} : memref<8x8x128xf32, #tpu.memory_space<vmem>>, vector<1x8x128xf32>,
    %c65_i32 = arith.constant 65 : i32
    %36 = vector.broadcast %c65_i32 : i32 to vector<8x128xi32>
    %37 = arith.cmpi eq, %3, %36 : vector<8x128xi32>
    %38 = arith.select %37, %4, %5 : vector<8x128xi1>, vector<8x128xf32>
    %c5 = arith.constant 5 : index
    %c0_16 = arith.constant 0 : index
    %c0_17 = arith.constant 0 : index
    %39 = vector.load %arg5[%c5, %c0_16, %c0_17] : memref<8x8x128xf32, #tpu.memory_space<vmem>>, vector<1x8x128xf32>
    %40 = vector.shape_cast %39 : vector<1x8x128xf32> to vector<8x128xf32>
    %41 = vector.shape_cast %38 : vector<8x128xf32> to vector<1x8x128xf32>
    tpu.vector_store %arg5[%c5, %c0_16, %c0_17], %41 {strides = array<i32>} : memref<8x8x128xf32, #tpu.memory_space<vmem>>, vector<1x8x128xf32>,
    %c72_i32 = arith.constant 72 : i32
    %42 = vector.broadcast %c72_i32 : i32 to vector<8x128xi32>
    %43 = arith.cmpi eq, %3, %42 : vector<8x128xi32>
    %44 = arith.select %43, %4, %5 : vector<8x128xi1>, vector<8x128xf32>
    %c6 = arith.constant 6 : index
    %c0_18 = arith.constant 0 : index
    %c0_19 = arith.constant 0 : index
    %45 = vector.load %arg5[%c6, %c0_18, %c0_19] : memref<8x8x128xf32, #tpu.memory_space<vmem>>, vector<1x8x128xf32>
    %46 = vector.shape_cast %45 : vector<1x8x128xf32> to vector<8x128xf32>
    %47 = vector.shape_cast %44 : vector<8x128xf32> to vector<1x8x128xf32>
    tpu.vector_store %arg5[%c6, %c0_18, %c0_19], %47 {strides = array<i32>} : memref<8x8x128xf32, #tpu.memory_space<vmem>>, vector<1x8x128xf32>,
    %c73_i32 = arith.constant 73 : i32
    %48 = vector.broadcast %c73_i32 : i32 to vector<8x128xi32>
    %49 = arith.cmpi eq, %3, %48 : vector<8x128xi32>
    %50 = arith.select %49, %4, %5 : vector<8x128xi1>, vector<8x128xf32>
    %c7 = arith.constant 7 : index
    %c0_20 = arith.constant 0 : index
    %c0_21 = arith.constant 0 : index
    %51 = vector.load %arg5[%c7, %c0_20, %c0_21] : memref<8x8x128xf32, #tpu.memory_space<vmem>>, vector<1x8x128xf32>
    %52 = vector.shape_cast %51 : vector<1x8x128xf32> to vector<8x128xf32>
    %53 = vector.shape_cast %50 : vector<8x128xf32> to vector<1x8x128xf32>
    tpu.vector_store %arg5[%c7, %c0_20, %c0_21], %53 {strides = array<i32>} : memref<8x8x128xf32, #tpu.memory_space<vmem>>, vector<1x8x128xf32>,
    return
  }
  func.func @transform_0(%arg0: i32, %arg1: i32) -> (i32, i32) {
    %c0_i32 = arith.constant 0 : i32
    %c0_i32_0 = arith.constant 0 : i32
    return %c0_i32, %arg0 : i32, i32
  }
  func.func @transform_1(%arg0: i32, %arg1: i32) -> (i32, i32) {
    %c0_i32 = arith.constant 0 : i32
    return %arg1, %arg0 : i32, i32
  }
  func.func @transform_2(%arg0: i32, %arg1: i32) -> (i32, i32) {
    %c0_i32 = arith.constant 0 : i32
    return %arg1, %arg0 : i32, i32
  }
  func.func @transform_3(%arg0: i32, %arg1: i32) -> (i32, i32, i32) {
    %c0_i32 = arith.constant 0 : i32
    %c0_i32_0 = arith.constant 0 : i32
    return %c0_i32, %arg1, %arg0 : i32, i32, i32
  }
}

</mosaic_0001>

<llo_original>
// kernel: tpu_custom_call.1
$region0: #{tpu_custom_call.1}
  #allocation0 [shape = 'u32[]', space=smem, size = 0x4, offset = 0x4, fixed_abs, tag = 'smem constant byte address 0x4 - core index']
  #allocation1 [shape = 'u32[144,128]{1,0:T(1,128)}', space=vmem, size = 0x12000, scoped, tag = 'internal scratch']
  %s0 = inlined_call_operand.hbm [shape: s32[1,128], index: 0, kind: input, shape index: {}]
  %s1 = inlined_call_operand.hbm [shape: f32[8,128], index: 1, kind: input, shape index: {}]
  %s2 = inlined_call_operand.hbm [shape: s32[8,128], index: 2, kind: input, shape index: {}]
  %s3 = inlined_call_operand.hbm [shape: f32[8,8,128], index: 3, kind: output, shape index: {}]
  %s4 = sld [smem:[#allocation0]]
  $region34: #{tpu_custom_call.1} parent=0
    _
  %s6 = ssub.s32 1, %s4
  %s7 = scalar_select 0, %s6, %s4
  $region1: #{tpu_custom_call.1} parent=0
    #allocation2 [shape = 'u8[512]{0}', space=vmem, size = 0x400, scoped, tag = 'input window, operand 0, single buffered']
    #allocation3 [shape = 's32[1]{0}', space=sflag, size = 0x4, scoped, tag = 'scoped memory for tpu_custom_call.1']
    #allocation4 [shape = 's32[1]{0}', space=sflag, size = 0x4, scoped, tag = 'scoped memory for tpu_custom_call.1']
    #allocation5 [shape = 'u8[4096]{0}', space=vmem, size = 0x1000, scoped, tag = 'input window, operand 1, single buffered']
    #allocation6 [shape = 's32[1]{0}', space=sflag, size = 0x4, scoped, tag = 'scoped memory for tpu_custom_call.1']
    #allocation7 [shape = 'u8[4096]{0}', space=vmem, size = 0x1000, scoped, tag = 'input window, operand 2, single buffered']
    #allocation8 [shape = 'u8[32768]{0}', space=vmem, size = 0x8000, scoped, tag = 'output window, operand 0, single buffered']
    %8 = vsyncpa [#allocation3], 0
    %9 = vsyncpa [#allocation6], 0
    %10 = vsyncpa [#allocation4], 0
    // Predicated region
    $region2: #{tpu_custom_call.1} parent=1 // pred_check
      _
    $region3: #{tpu_custom_call.1} parent=1 // pred_check_branch
      %12 = sbr.rel (0) target = $region5
    $region4: #{tpu_custom_call.1} parent=1 // pred_region
      %s14 = ssub.s32 16, 16
      %15 = vsyncadd [#allocation3], %s14
      %s17 = sshll.u32 [#allocation2], 4
      %s18 = int_to_ptr.vmem [resolvable:$true] %s17
      %20 = dma.hbm_to_vmem [thread:$0]  %s0, 16, %s18, [#allocation3]
    $region5: #{tpu_custom_call.1} parent=1 // pred_fallthru
      _
    // Predicated region
    $region6: #{tpu_custom_call.1} parent=1 // pred_check
      _
    $region7: #{tpu_custom_call.1} parent=1 // pred_check_branch
      %22 = sbr.rel (0) target = $region9
    $region8: #{tpu_custom_call.1} parent=1 // pred_region
      %s24 = ssub.s32 128, 128
      %25 = vsyncadd [#allocation6], %s24
      %s27 = sshll.u32 [#allocation5], 4
      %s28 = int_to_ptr.vmem [resolvable:$true] %s27
      %30 = dma.hbm_to_vmem [thread:$0]  %s1, 128, %s28, [#allocation6]
    $region9: #{tpu_custom_call.1} parent=1 // pred_fallthru
      _
    // Predicated region
    $region10: #{tpu_custom_call.1} parent=1 // pred_check
      _
    $region11: #{tpu_custom_call.1} parent=1 // pred_check_branch
      %32 = sbr.rel (0) target = $region13
    $region12: #{tpu_custom_call.1} parent=1 // pred_region
      %s34 = ssub.s32 128, 128
      %35 = vsyncadd [#allocation6], %s34
      %s37 = sshll.u32 [#allocation7], 4
      %s38 = int_to_ptr.vmem [resolvable:$true] %s37
      %40 = dma.hbm_to_vmem [thread:$0]  %s2, 128, %s38, [#allocation6]
    $region13: #{tpu_custom_call.1} parent=1 // pred_fallthru
      _
    // Predicated region
    $region14: #{tpu_custom_call.1} parent=1 // pred_check
      _
    $region15: #{tpu_custom_call.1} parent=1 // pred_check_branch
      %42 = sbr.rel (0) target = $region17
    $region16: #{tpu_custom_call.1} parent=1 // pred_region
      %43 = dma.done [#allocation3], 16
    $region17: #{tpu_custom_call.1} parent=1 // pred_fallthru
      _
    // Predicated region
    $region18: #{tpu_custom_call.1} parent=1 // pred_check
      _
    $region19: #{tpu_custom_call.1} parent=1 // pred_check_branch
      %45 = sbr.rel (0) target = $region21
    $region20: #{tpu_custom_call.1} parent=1 // pred_region
      %46 = dma.done [#allocation6], 128
    $region21: #{tpu_custom_call.1} parent=1 // pred_fallthru
      _
    // Predicated region
    $region22: #{tpu_custom_call.1} parent=1 // pred_check
      _
    $region23: #{tpu_custom_call.1} parent=1 // pred_check_branch
      %48 = sbr.rel (0) target = $region25
    $region24: #{tpu_custom_call.1} parent=1 // pred_region
      %49 = dma.done [#allocation6], 128
    $region25: #{tpu_custom_call.1} parent=1 // pred_fallthru
      _
    %v50 = vld [vmem:[#allocation7] sm:$0xff]
    %v51 = vld [vmem:[#allocation2] sm:$0x1]
    %v52 = vlaneseq
    %v53 = vshrl.u32 %v52, 7
    %v54 = vsub.s32 0, %v53
    %v55 = vrot.slane %v51, %v54
    %v56 = vsub.s32 %v50, %v55
    %v57 = vld [vmem:[#allocation5] sm:$0xff]
    %vm58 = vcmp.eq.s32.totalorder %v56, 0
    %v59 = vsel %vm58, %v57, 0.0
    %60 = vst [vmem:[#allocation8] sm:$0xff] %v59
    %vm61 = vcmp.eq.s32.totalorder %v56, 1
    %v62 = vsel %vm61, %v57, 0.0
    %s63 = scalar_lea.vmem [#allocation8], 8
    %64 = vst [vmem:[%s63] sm:$0xff] %v62
    %vm65 = vcmp.eq.s32.totalorder %v56, 8
    %v66 = vsel %vm65, %v57, 0.0
    %s67 = scalar_lea.vmem [#allocation8], 16
    %68 = vst [vmem:[%s67] sm:$0xff] %v66
    %vm69 = vcmp.eq.s32.totalorder %v56, 9
    %v70 = vsel %vm69, %v57, 0.0
    %s71 = scalar_lea.vmem [#allocation8], 24
    %72 = vst [vmem:[%s71] sm:$0xff] %v70
    %vm73 = vcmp.eq.s32.totalorder %v56, 64
    %v74 = vsel %vm73, %v57, 0.0
    %s75 = scalar_lea.vmem [#allocation8], 32
    %76 = vst [vmem:[%s75] sm:$0xff] %v74
    %vm77 = vcmp.eq.s32.totalorder %v56, 65
    %v78 = vsel %vm77, %v57, 0.0
    %s79 = scalar_lea.vmem [#allocation8], 40
    %80 = vst [vmem:[%s79] sm:$0xff] %v78
    %vm81 = vcmp.eq.s32.totalorder %v56, 72
    %v82 = vsel %vm81, %v57, 0.0
    %s83 = scalar_lea.vmem [#allocation8], 48
    %84 = vst [vmem:[%s83] sm:$0xff] %v82
    %vm85 = vcmp.eq.s32.totalorder %v56, 73
    %v86 = vsel %vm85, %v57, 0.0
    %s87 = scalar_lea.vmem [#allocation8], 56
    %88 = vst [vmem:[%s87] sm:$0xff] %v86
    // Predicated region
    $region26: #{tpu_custom_call.1} parent=1 // pred_check
      _
    $region27: #{tpu_custom_call.1} parent=1 // pred_check_branch
      %90 = sbr.rel (0) target = $region29
    $region28: #{tpu_custom_call.1} parent=1 // pred_region
      %s92 = ssub.s32 1024, 1024
      %93 = vsyncadd [#allocation4], %s92
      %s94 = sshll.u32 [#allocation8], 4
      %s95 = int_to_ptr.vmem [resolvable:$true] %s94
      %100 = dma.vmem_to_hbm [thread:$0]  %s95, 1024, %s3, [#allocation4], 128, 128, 8
    $region29: #{tpu_custom_call.1} parent=1 // pred_fallthru
      _
    // Predicated region
    $region30: #{tpu_custom_call.1} parent=1 // pred_check
      _
    $region31: #{tpu_custom_call.1} parent=1 // pred_check_branch
      %102 = sbr.rel (0) target = $region33
    $region32: #{tpu_custom_call.1} parent=1 // pred_region
      %103 = dma.done [#allocation4], 1024
    $region33: #{tpu_custom_call.1} parent=1 // pred_fallthru
      _
    %104 = vsyncpa [#allocation3], 1
    %105 = vsyncpa [#allocation6], 1
    %106 = vsyncpa [#allocation4], 1

</llo_original>
